<compile_context>
chip_gen: v5e
topology: v5e:2x2
jax: 0.10.0
libtpu: 0.0.40
codegen_flags: <defaults>
</compile_context>

<pallas_src>
import functools

import numpy as np
import jax
import jax.numpy as jnp
from jax.experimental import pallas as pl
from jax.experimental.pallas import tpu as pltpu


# Fixed architecture constants from the nn.Module.
_C1 = 16            # conv1 / deconv1 channels
_C2 = 32            # conv2 channels
_K1, _P1 = 5, 2     # conv1 / deconv1 kernel size & padding
_K2, _P2 = 3, 1     # conv2 / deconv2 kernel size & padding
_DP1 = _K1 - 1 - _P1   # equivalent-conv padding for ConvTranspose1d #1 (stride=1)
_DP2 = _K2 - 1 - _P2   # equivalent-conv padding for ConvTranspose1d #2
_HID = 64           # fc hidden width


# ---------------------------------------------------------------------------
# Fused Pallas kernel: the entire VAE forward, VMEM-resident, batch-folded.
# ---------------------------------------------------------------------------

def _vae_fused_kernel(
    x_ref, eps_ref,
    w1_ref, b1_ref, se1_ref, so1_ref,
    w2_ref, b2_ref, se2_ref, so2_ref,
    wenc_ref, benc_ref, wheads_ref, bheads_ref,
    wdec1_ref, bdec1_ref, wdec2_ref, bdec2_ref,
    bw1_ref, bd1_ref, bw2_ref, bd2_ref,
    xhat_ref, zmean_ref, zlogvar_ref,
    *, batch, num_channels, seq_len, latent_dim, neg_slope,
):
    f32 = jnp.float32
    B, C, L = batch, num_channels, seq_len
    Lh, Lq = L // 2, L // 4
    Lp1 = L + 2 * _P1            # per-batch padded width for conv1
    Lp2 = Lh + 2 * _P2           # per-batch padded width for conv2
    R1 = B * Lp1                 # lane width of the conv1 stage (all batches)
    R2 = B * Lp2                 # lane width of the conv2 stage (all batches)

    def leaky(v):
        return jnp.where(v >= 0, v, neg_slope * v)

    def mm(a, b):
        return jnp.dot(a, b, preferred_element_type=f32)

    def mm_ta(a, b):
        # contraction over dim 0 of BOTH operands (transposed-LHS matmul);
        # used to flip the encoder's (features, batch) layout into (batch,
        # features) without an explicit transpose op.
        return jax.lax.dot_general(
            a, b, dimension_numbers=(((0,), (0,)), ((), ())),
            preferred_element_type=f32)

    # ---------------- encoder: channels-first, batch stacked on lanes -------
    # Padded input slab (C, R1 + K1 - 1): [0 | x_b | 0] blocks per batch + tail.
    zc1 = jnp.zeros((C, _P1), f32)
    pieces = []
    for b in range(B):
        pieces += [zc1, x_ref[b], zc1]
    pieces.append(jnp.zeros((C, _K1 - 1), f32))
    xw = jnp.concatenate(pieces, axis=1)                          # (C, R1+K1-1)

    # conv1: K taps concatenated along the contraction axis -> one matmul.
    im1 = jnp.concatenate([xw[:, k:k + R1] for k in range(_K1)], axis=0)
    h1 = leaky(mm(w1_ref[...], im1) + b1_ref[...])                # (C1, R1)

    # pool1 (+ zero re-padding for conv2) via precomputed 0/1 selections.
    p1 = jnp.maximum(mm(h1, se1_ref[...]), mm(h1, so1_ref[...]))  # (C1, R2+K2-1)

    # conv2: one matmul over the K2*C1 = 48 contraction.
    im2 = jnp.concatenate([p1[:, k:k + R2] for k in range(_K2)], axis=0)
    h2 = leaky(mm(w2_ref[...], im2) + b2_ref[...])                # (C2, R2)

    # pool2, output columns ordered (l, b) so the flatten is a plain concat.
    p2 = jnp.maximum(mm(h2, se2_ref[...]), mm(h2, so2_ref[...]))  # (C2, Lq*B)

    flatT = jnp.concatenate(
        [p2[:, l * B:(l + 1) * B] for l in range(Lq)], axis=0)    # (Lq*C2, B)

    # fc_enc1: single K=128 contraction for the whole batch.
    enc = leaky(mm_ta(flatT, wenc_ref[...]) + benc_ref[...])      # (B, HID)

    # fused mean/logvar heads + reparameterization (single batched stores).
    heads = mm(enc, wheads_ref[...]) + bheads_ref[...]            # (B, 2*latent)
    z_mean = heads[:, 0:latent_dim]
    z_logvar = heads[:, latent_dim:2 * latent_dim]
    z = z_mean + eps_ref[...] * jnp.exp(0.5 * z_logvar)

    zmean_ref[...] = z_mean
    zlogvar_ref[...] = z_logvar

    # ---------------- decoder: batch stacked on sublanes --------------------
    d1 = leaky(mm(z, wdec1_ref[...]) + bdec1_ref[...])            # (B, HID)
    d2 = leaky(mm(d1, wdec2_ref[...]) + bdec2_ref[...])           # (B, L) == unflatten

    # deconv1 (ConvTranspose1d(1,16,5,p=2) as equivalent conv): block-diagonal
    # weight over batch, taps concatenated -> one matmul.
    zp1 = jnp.zeros((B, _DP1), f32)
    d2p = jnp.concatenate([zp1, d2, zp1], axis=1)                 # (B, L+2*DP1)
    d1cat = jnp.concatenate([d2p[:, k:k + L] for k in range(_K1)], axis=0)
    hd1 = leaky(mm(bw1_ref[...], d1cat) + bd1_ref[...])           # (B*C1, L)

    # deconv2 (ConvTranspose1d(16,C,3,p=1) as equivalent conv) + tanh.
    zp2 = jnp.zeros((B * _C1, _DP2), f32)
    hd1p = jnp.concatenate([zp2, hd1, zp2], axis=1)               # (B*C1, L+2*DP2)
    d2cat = jnp.concatenate([hd1p[:, k:k + L] for k in range(_K2)], axis=0)
    out = jnp.tanh(mm(bw2_ref[...], d2cat) + bd2_ref[...])        # (B*C, L)

    xhat_ref[...] = out                                           # single store


# ---------------------------------------------------------------------------
# Parameters: raw init (same shapes as the nn.Module) + one-time layout prep.
# ---------------------------------------------------------------------------

def init_vae_params(key, latent_dim, num_channels, seq_len):
    """Deterministic synthetic parameters (shapes match the nn.Module)."""
    fc_size = _C2 * (seq_len // 4)
    ks = jax.random.split(key, 18)
    s = 0.1

    def w(k, shape):
        return (s * jax.random.normal(k, shape)).astype(jnp.float32)

    return {
        "conv1_w": w(ks[0], (_C1, num_channels, _K1)),
        "conv1_b": w(ks[1], (_C1,)),
        "conv2_w": w(ks[2], (_C2, _C1, _K2)),
        "conv2_b": w(ks[3], (_C2,)),
        # fc weights stored as (in, out): y = x @ W + b
        "fc_enc1_w": w(ks[4], (fc_size, _HID)),
        "fc_enc1_b": w(ks[5], (_HID,)),
        "fc_mean_w": w(ks[6], (_HID, latent_dim)),
        "fc_mean_b": w(ks[7], (latent_dim,)),
        "fc_logvar_w": w(ks[8], (_HID, latent_dim)),
        "fc_logvar_b": w(ks[9], (latent_dim,)),
        "fc_dec1_w": w(ks[10], (latent_dim, _HID)),
        "fc_dec1_b": w(ks[11], (_HID,)),
        "fc_dec2_w": w(ks[12], (_HID, seq_len)),
        "fc_dec2_b": w(ks[13], (seq_len,)),
        # ConvTranspose1d weights in PyTorch layout (Cin, Cout, K)
        "deconv1_w": w(ks[14], (1, _C1, _K1)),
        "deconv1_b": w(ks[15], (_C1,)),
        "deconv2_w": w(ks[16], (_C1, num_channels, _K2)),
        "deconv2_b": w(ks[17], (num_channels,)),
    }


def prepare_params(p, seq_len, batch):
    """One-time host-side weight / selection-matrix layout prep."""
    B, L = batch, seq_len
    assert L % 4 == 0, "MaxPool1d(2) x2 path assumes seq_len divisible by 4"
    Lh, Lq = L // 2, L // 4
    Lp1 = L + 2 * _P1
    Lp2 = Lh + 2 * _P2
    R1, R2 = B * Lp1, B * Lp2
    Cin = p["conv1_w"].shape[1]
    f32 = jnp.float32

    # Encoder convs as (Cout, K*Cin): each conv becomes one matmul over taps.
    w1cf = jnp.transpose(p["conv1_w"], (0, 2, 1)).reshape(_C1, _K1 * Cin)
    w2cf = jnp.transpose(p["conv2_w"], (0, 2, 1)).reshape(_C2, _K2 * _C1)

    # MaxPool1d(2) even/odd selections; pool1 also re-inserts conv2 zero pad.
    se1 = np.zeros((R1, R2 + _K2 - 1), np.float32)
    so1 = np.zeros((R1, R2 + _K2 - 1), np.float32)
    for b in range(B):
        for j in range(Lh):
            se1[b * Lp1 + 2 * j, b * Lp2 + _P2 + j] = 1.0
            so1[b * Lp1 + 2 * j + 1, b * Lp2 + _P2 + j] = 1.0
    # pool2 output columns ordered (l, b) so the flatten is a plain concat.
    se2 = np.zeros((R2, Lq * B), np.float32)
    so2 = np.zeros((R2, Lq * B), np.float32)
    for b in range(B):
        for l in range(Lq):
            se2[b * Lp2 + 2 * l, l * B + b] = 1.0
            so2[b * Lp2 + 2 * l + 1, l * B + b] = 1.0

    # fc_enc1 rows permuted to the kernel's (l, c) flatten order (torch order
    # is c*Lq + l) -> one K=128 contraction.
    wenc = (p["fc_enc1_w"].reshape(_C2, Lq, _HID)
            .transpose(1, 0, 2).reshape(Lq * _C2, _HID))
    # Fused mean/logvar heads.
    wheads = jnp.concatenate([p["fc_mean_w"], p["fc_logvar_w"]], axis=1)
    bheads = jnp.concatenate([p["fc_mean_b"], p["fc_logvar_b"]], axis=0)

    # ConvTranspose1d (stride=1) -> equivalent Conv1d (flip taps, swap chans),
    # then block-diagonal over batch with taps concatenated -> one matmul each.
    weq1 = jnp.flip(p["deconv1_w"], axis=-1)[0]                        # (C1, K1)
    weq2 = jnp.transpose(jnp.flip(p["deconv2_w"], axis=-1), (1, 0, 2)) # (C, C1, K2)
    eye_b = jnp.eye(B, dtype=f32)
    bw1 = jnp.concatenate(
        [jnp.kron(eye_b, weq1[:, k:k + 1]) for k in range(_K1)], axis=1)
    bw2 = jnp.concatenate(
        [jnp.kron(eye_b, weq2[:, :, k]) for k in range(_K2)], axis=1)

    return {
        "W1": w1cf, "b1": p["conv1_b"].reshape(-1, 1),
        "SE1": jnp.asarray(se1), "SO1": jnp.asarray(so1),
        "W2": w2cf, "b2": p["conv2_b"].reshape(-1, 1),
        "SE2": jnp.asarray(se2), "SO2": jnp.asarray(so2),
        "Wenc": wenc, "benc": p["fc_enc1_b"].reshape(1, -1),
        "Wheads": wheads, "bheads": bheads.reshape(1, -1),
        "Wdec1": p["fc_dec1_w"], "bdec1": p["fc_dec1_b"].reshape(1, -1),
        "Wdec2": p["fc_dec2_w"], "bdec2": p["fc_dec2_b"].reshape(1, -1),
        "BW1": bw1, "bd1": jnp.tile(p["deconv1_b"], B).reshape(-1, 1),
        "BW2": bw2, "bd2": jnp.tile(p["deconv2_b"], B).reshape(-1, 1),
    }


# ---------------------------------------------------------------------------
# Forward wrapper: single grid-less pallas_call, everything VMEM-resident.
# ---------------------------------------------------------------------------

def vae_forward(prepared, x, eps, neg_slope=0.01):
    """x: (B, C, L) float32, eps: (B, latent).  Returns (x_hat, z_mean, z_logvar)."""
    B, C, L = x.shape
    latent = eps.shape[1]

    kernel = functools.partial(
        _vae_fused_kernel, batch=B, num_channels=C, seq_len=L,
        latent_dim=latent, neg_slope=neg_slope)

    vmem = pl.BlockSpec(memory_space=pltpu.MemorySpace.VMEM)
    inputs = (
        x.astype(jnp.float32), eps.astype(jnp.float32),
        prepared["W1"], prepared["b1"], prepared["SE1"], prepared["SO1"],
        prepared["W2"], prepared["b2"], prepared["SE2"], prepared["SO2"],
        prepared["Wenc"], prepared["benc"],
        prepared["Wheads"], prepared["bheads"],
        prepared["Wdec1"], prepared["bdec1"],
        prepared["Wdec2"], prepared["bdec2"],
        prepared["BW1"], prepared["bd1"],
        prepared["BW2"], prepared["bd2"],
    )

    xhat_flat, z_mean, z_logvar = pl.pallas_call(
        kernel,
        out_shape=(
            jax.ShapeDtypeStruct((B * C, L), jnp.float32),
            jax.ShapeDtypeStruct((B, latent), jnp.float32),
            jax.ShapeDtypeStruct((B, latent), jnp.float32),
        ),
        in_specs=[vmem] * len(inputs),
        out_specs=(vmem, vmem, vmem),
        compiler_params=pltpu.CompilerParams(
            vmem_limit_bytes=32 * 1024 * 1024),
    )(*inputs)

    # (B*C, L) -> (B, C, L) is a pure row-major reinterpretation (free).
    return xhat_flat.reshape(B, C, L), z_mean, z_logvar


# ---------------------------------------------------------------------------
# Main
# ---------------------------------------------------------------------------

if __name__ == "__main__":
    B, C, L = 2, 4, 16          # input_shape = (_, num_channels, sequence_length)
    latent_dim = 8

    key = jax.random.PRNGKey(0)
    k_x, k_eps, k_params = jax.random.split(key, 3)

    x = jax.random.normal(k_x, (B, C, L), dtype=jnp.float32)
    eps = jax.random.normal(k_eps, (B, latent_dim), dtype=jnp.float32)

    raw_params = init_vae_params(k_params, latent_dim, C, L)
    prepared = prepare_params(raw_params, L, B)     # one-time host-side prep

    fwd = jax.jit(vae_forward)
    x_hat, z_mean, z_logvar = fwd(prepared, x, eps)
    jax.block_until_ready((x_hat, z_mean, z_logvar))

    assert x_hat.shape == (B, C, L)
    assert z_mean.shape == (B, latent_dim)
    assert z_logvar.shape == (B, latent_dim)
    assert bool(jnp.all(jnp.isfinite(x_hat)))
    assert bool(jnp.all(jnp.isfinite(z_mean)))
    assert bool(jnp.all(jnp.isfinite(z_logvar)))
    print("KERNEL_OK")
</pallas_src>

<mosaic_0001>
module attributes {stable_mosaic.version = 11 : i64} {
  func.func @_vae_fused_kernel(%arg0: memref<2x4x16xf32, #tpu.memory_space<vmem>>, %arg1: memref<2x8xf32, #tpu.memory_space<vmem>>, %arg2: memref<16x20xf32, #tpu.memory_space<vmem>>, %arg3: memref<16x1xf32, #tpu.memory_space<vmem>>, %arg4: memref<40x22xf32, #tpu.memory_space<vmem>>, %arg5: memref<40x22xf32, #tpu.memory_space<vmem>>, %arg6: memref<32x48xf32, #tpu.memory_space<vmem>>, %arg7: memref<32x1xf32, #tpu.memory_space<vmem>>, %arg8: memref<20x8xf32, #tpu.memory_space<vmem>>, %arg9: memref<20x8xf32, #tpu.memory_space<vmem>>, %arg10: memref<128x64xf32, #tpu.memory_space<vmem>>, %arg11: memref<1x64xf32, #tpu.memory_space<vmem>>, %arg12: memref<64x16xf32, #tpu.memory_space<vmem>>, %arg13: memref<1x16xf32, #tpu.memory_space<vmem>>, %arg14: memref<8x64xf32, #tpu.memory_space<vmem>>, %arg15: memref<1x64xf32, #tpu.memory_space<vmem>>, %arg16: memref<64x16xf32, #tpu.memory_space<vmem>>, %arg17: memref<1x16xf32, #tpu.memory_space<vmem>>, %arg18: memref<32x10xf32, #tpu.memory_space<vmem>>, %arg19: memref<32x1xf32, #tpu.memory_space<vmem>>, %arg20: memref<8x96xf32, #tpu.memory_space<vmem>>, %arg21: memref<8x1xf32, #tpu.memory_space<vmem>>, %arg22: memref<8x16xf32, #tpu.memory_space<vmem>>, %arg23: memref<2x8xf32, #tpu.memory_space<vmem>>, %arg24: memref<2x8xf32, #tpu.memory_space<vmem>>) attributes {dimension_semantics = [], scalar_prefetch = 0 : i64, scratch_operands = 0 : i64, tpu.core_type = #tpu.core_type<tc>} {
    %cst = arith.constant 0.000000e+00 : f32
    %0 = vector.broadcast %cst : f32 to vector<4x2xf32>
    %c0 = arith.constant 0 : index
    %c0_0 = arith.constant 0 : index
    %c0_1 = arith.constant 0 : index
    %1 = vector.load %arg0[%c0, %c0_0, %c0_1] : memref<2x4x16xf32, #tpu.memory_space<vmem>>, vector<1x4x16xf32>
    %2 = vector.shape_cast %1 : vector<1x4x16xf32> to vector<4x16xf32>
    %c1 = arith.constant 1 : index
    %c0_2 = arith.constant 0 : index
    %c0_3 = arith.constant 0 : index
    %3 = vector.load %arg0[%c1, %c0_2, %c0_3] : memref<2x4x16xf32, #tpu.memory_space<vmem>>, vector<1x4x16xf32>
    %4 = vector.shape_cast %3 : vector<1x4x16xf32> to vector<4x16xf32>
    %cst_4 = arith.constant 0.000000e+00 : f32
    %5 = vector.broadcast %cst_4 : f32 to vector<4x4xf32>
    %6 = tpu.concatenate %0, %2, %0, %0, %4, %0, %5 in 1 : vector<4x2xf32>, vector<4x16xf32>, vector<4x2xf32>, vector<4x2xf32>, vector<4x16xf32>, vector<4x2xf32>, vector<4x4xf32> -> vector<4x44xf32>
    %7 = vector.extract_strided_slice %6 {offsets = [0, 0], sizes = [4, 40], strides = [1, 1]} : vector<4x44xf32> to vector<4x40xf32>
    %8 = vector.extract_strided_slice %6 {offsets = [0, 1], sizes = [4, 40], strides = [1, 1]} : vector<4x44xf32> to vector<4x40xf32>
    %9 = vector.extract_strided_slice %6 {offsets = [0, 2], sizes = [4, 40], strides = [1, 1]} : vector<4x44xf32> to vector<4x40xf32>
    %10 = vector.extract_strided_slice %6 {offsets = [0, 3], sizes = [4, 40], strides = [1, 1]} : vector<4x44xf32> to vector<4x40xf32>
    %11 = vector.extract_strided_slice %6 {offsets = [0, 4], sizes = [4, 40], strides = [1, 1]} : vector<4x44xf32> to vector<4x40xf32>
    %12 = tpu.concatenate %7, %8, %9, %10, %11 in 0 : vector<4x40xf32>, vector<4x40xf32>, vector<4x40xf32>, vector<4x40xf32>, vector<4x40xf32> -> vector<20x40xf32>
    %c0_5 = arith.constant 0 : index
    %c0_6 = arith.constant 0 : index
    %13 = vector.load %arg2[%c0_5, %c0_6] : memref<16x20xf32, #tpu.memory_space<vmem>>, vector<16x20xf32>
    %cst_7 = arith.constant dense<0.000000e+00> : vector<16x40xf32>
    %14 = tpu.matmul %13, %12, %cst_7 {dimension_numbers = #tpu.dot_dimension_numbers<[1], [0], [0], [1], [0, 0, 1, 1], [], []>} : vector<16x20xf32>, vector<20x40xf32>, vector<16x40xf32> -> vector<16x40xf32>
    %c0_8 = arith.constant 0 : index
    %c0_9 = arith.constant 0 : index
    %15 = vector.load %arg3[%c0_8, %c0_9] : memref<16x1xf32, #tpu.memory_space<vmem>>, vector<16x1xf32>
    %16 = vector.broadcast %15 : vector<16x1xf32> to vector<16x40xf32>
    %17 = arith.addf %14, %16 : vector<16x40xf32>
    %cst_10 = arith.constant 0.000000e+00 : f32
    %18 = vector.broadcast %cst_10 : f32 to vector<16x40xf32>
    %19 = arith.cmpf oge, %17, %18 : vector<16x40xf32>
    %cst_11 = arith.constant 0.00999999977 : f32
    %20 = vector.broadcast %cst_11 : f32 to vector<16x40xf32>
    %21 = arith.mulf %20, %17 : vector<16x40xf32>
    %22 = arith.select %19, %17, %21 : vector<16x40xi1>, vector<16x40xf32>
    %c0_12 = arith.constant 0 : index
    %c0_13 = arith.constant 0 : index
    %23 = vector.load %arg4[%c0_12, %c0_13] : memref<40x22xf32, #tpu.memory_space<vmem>>, vector<40x22xf32>
    %cst_14 = arith.constant dense<0.000000e+00> : vector<16x22xf32>
    %24 = tpu.matmul %22, %23, %cst_14 {dimension_numbers = #tpu.dot_dimension_numbers<[1], [0], [0], [1], [0, 0, 1, 1], [], []>} : vector<16x40xf32>, vector<40x22xf32>, vector<16x22xf32> -> vector<16x22xf32>
    %c0_15 = arith.constant 0 : index
    %c0_16 = arith.constant 0 : index
    %25 = vector.load %arg5[%c0_15, %c0_16] : memref<40x22xf32, #tpu.memory_space<vmem>>, vector<40x22xf32>
    %cst_17 = arith.constant dense<0.000000e+00> : vector<16x22xf32>
    %26 = tpu.matmul %22, %25, %cst_17 {dimension_numbers = #tpu.dot_dimension_numbers<[1], [0], [0], [1], [0, 0, 1, 1], [], []>} : vector<16x40xf32>, vector<40x22xf32>, vector<16x22xf32> -> vector<16x22xf32>
    %27 = arith.maximumf %24, %26 : vector<16x22xf32>
    %28 = vector.extract_strided_slice %27 {offsets = [0, 0], sizes = [16, 20], strides = [1, 1]} : vector<16x22xf32> to vector<16x20xf32>
    %29 = vector.extract_strided_slice %27 {offsets = [0, 1], sizes = [16, 20], strides = [1, 1]} : vector<16x22xf32> to vector<16x20xf32>
    %30 = vector.extract_strided_slice %27 {offsets = [0, 2], sizes = [16, 20], strides = [1, 1]} : vector<16x22xf32> to vector<16x20xf32>
    %31 = tpu.concatenate %28, %29, %30 in 0 : vector<16x20xf32>, vector<16x20xf32>, vector<16x20xf32> -> vector<48x20xf32>
    %c0_18 = arith.constant 0 : index
    %c0_19 = arith.constant 0 : index
    %32 = vector.load %arg6[%c0_18, %c0_19] : memref<32x48xf32, #tpu.memory_space<vmem>>, vector<32x48xf32>
    %cst_20 = arith.constant dense<0.000000e+00> : vector<32x20xf32>
    %33 = tpu.matmul %32, %31, %cst_20 {dimension_numbers = #tpu.dot_dimension_numbers<[1], [0], [0], [1], [0, 0, 1, 1], [], []>} : vector<32x48xf32>, vector<48x20xf32>, vector<32x20xf32> -> vector<32x20xf32>
    %c0_21 = arith.constant 0 : index
    %c0_22 = arith.constant 0 : index
    %34 = vector.load %arg7[%c0_21, %c0_22] : memref<32x1xf32, #tpu.memory_space<vmem>>, vector<32x1xf32>
    %35 = vector.broadcast %34 : vector<32x1xf32> to vector<32x20xf32>
    %36 = arith.addf %33, %35 : vector<32x20xf32>
    %cst_23 = arith.constant 0.000000e+00 : f32
    %37 = vector.broadcast %cst_23 : f32 to vector<32x20xf32>
    %38 = arith.cmpf oge, %36, %37 : vector<32x20xf32>
    %cst_24 = arith.constant 0.00999999977 : f32
    %39 = vector.broadcast %cst_24 : f32 to vector<32x20xf32>
    %40 = arith.mulf %39, %36 : vector<32x20xf32>
    %41 = arith.select %38, %36, %40 : vector<32x20xi1>, vector<32x20xf32>
    %c0_25 = arith.constant 0 : index
    %c0_26 = arith.constant 0 : index
    %42 = vector.load %arg8[%c0_25, %c0_26] : memref<20x8xf32, #tpu.memory_space<vmem>>, vector<20x8xf32>
    %cst_27 = arith.constant dense<0.000000e+00> : vector<32x8xf32>
    %43 = tpu.matmul %41, %42, %cst_27 {dimension_numbers = #tpu.dot_dimension_numbers<[1], [0], [0], [1], [0, 0, 1, 1], [], []>} : vector<32x20xf32>, vector<20x8xf32>, vector<32x8xf32> -> vector<32x8xf32>
    %c0_28 = arith.constant 0 : index
    %c0_29 = arith.constant 0 : index
    %44 = vector.load %arg9[%c0_28, %c0_29] : memref<20x8xf32, #tpu.memory_space<vmem>>, vector<20x8xf32>
    %cst_30 = arith.constant dense<0.000000e+00> : vector<32x8xf32>
    %45 = tpu.matmul %41, %44, %cst_30 {dimension_numbers = #tpu.dot_dimension_numbers<[1], [0], [0], [1], [0, 0, 1, 1], [], []>} : vector<32x20xf32>, vector<20x8xf32>, vector<32x8xf32> -> vector<32x8xf32>
    %46 = arith.maximumf %43, %45 : vector<32x8xf32>
    %47 = vector.extract_strided_slice %46 {offsets = [0, 0], sizes = [32, 2], strides = [1, 1]} : vector<32x8xf32> to vector<32x2xf32>
    %48 = vector.extract_strided_slice %46 {offsets = [0, 2], sizes = [32, 2], strides = [1, 1]} : vector<32x8xf32> to vector<32x2xf32>
    %49 = vector.extract_strided_slice %46 {offsets = [0, 4], sizes = [32, 2], strides = [1, 1]} : vector<32x8xf32> to vector<32x2xf32>
    %50 = vector.extract_strided_slice %46 {offsets = [0, 6], sizes = [32, 2], strides = [1, 1]} : vector<32x8xf32> to vector<32x2xf32>
    %51 = tpu.concatenate %47, %48, %49, %50 in 0 : vector<32x2xf32>, vector<32x2xf32>, vector<32x2xf32>, vector<32x2xf32> -> vector<128x2xf32>
    %c0_31 = arith.constant 0 : index
    %c0_32 = arith.constant 0 : index
    %52 = vector.load %arg10[%c0_31, %c0_32] : memref<128x64xf32, #tpu.memory_space<vmem>>, vector<128x64xf32>
    %cst_33 = arith.constant dense<0.000000e+00> : vector<2x64xf32>
    %53 = tpu.matmul %51, %52, %cst_33 {dimension_numbers = #tpu.dot_dimension_numbers<[0], [0], [1], [1], [0, 1, 1, 1], [], []>} : vector<128x2xf32>, vector<128x64xf32>, vector<2x64xf32> -> vector<2x64xf32>
    %c0_34 = arith.constant 0 : index
    %c0_35 = arith.constant 0 : index
    %54 = vector.load %arg11[%c0_34, %c0_35] : memref<1x64xf32, #tpu.memory_space<vmem>>, vector<1x64xf32>
    %55 = vector.broadcast %54 : vector<1x64xf32> to vector<2x64xf32>
    %56 = arith.addf %53, %55 : vector<2x64xf32>
    %cst_36 = arith.constant 0.000000e+00 : f32
    %57 = vector.broadcast %cst_36 : f32 to vector<2x64xf32>
    %58 = arith.cmpf oge, %56, %57 : vector<2x64xf32>
    %cst_37 = arith.constant 0.00999999977 : f32
    %59 = vector.broadcast %cst_37 : f32 to vector<2x64xf32>
    %60 = arith.mulf %59, %56 : vector<2x64xf32>
    %61 = arith.select %58, %56, %60 : vector<2x64xi1>, vector<2x64xf32>
    %c0_38 = arith.constant 0 : index
    %c0_39 = arith.constant 0 : index
    %62 = vector.load %arg12[%c0_38, %c0_39] : memref<64x16xf32, #tpu.memory_space<vmem>>, vector<64x16xf32>
    %cst_40 = arith.constant dense<0.000000e+00> : vector<2x16xf32>
    %63 = tpu.matmul %61, %62, %cst_40 {dimension_numbers = #tpu.dot_dimension_numbers<[1], [0], [0], [1], [0, 0, 1, 1], [], []>} : vector<2x64xf32>, vector<64x16xf32>, vector<2x16xf32> -> vector<2x16xf32>
    %c0_41 = arith.constant 0 : index
    %c0_42 = arith.constant 0 : index
    %64 = vector.load %arg13[%c0_41, %c0_42] : memref<1x16xf32, #tpu.memory_space<vmem>>, vector<1x16xf32>
    %65 = vector.broadcast %64 : vector<1x16xf32> to vector<2x16xf32>
    %66 = arith.addf %63, %65 : vector<2x16xf32>
    %67 = vector.extract_strided_slice %66 {offsets = [0, 0], sizes = [2, 8], strides = [1, 1]} : vector<2x16xf32> to vector<2x8xf32>
    %68 = vector.extract_strided_slice %66 {offsets = [0, 8], sizes = [2, 8], strides = [1, 1]} : vector<2x16xf32> to vector<2x8xf32>
    %c0_43 = arith.constant 0 : index
    %c0_44 = arith.constant 0 : index
    %69 = vector.load %arg1[%c0_43, %c0_44] : memref<2x8xf32, #tpu.memory_space<vmem>>, vector<2x8xf32>
    %cst_45 = arith.constant 5.000000e-01 : f32
    %70 = vector.broadcast %cst_45 : f32 to vector<2x8xf32>
    %71 = arith.mulf %70, %68 : vector<2x8xf32>
    %72 = math.exp %71 : vector<2x8xf32>
    %73 = arith.mulf %69, %72 : vector<2x8xf32>
    %74 = arith.addf %67, %73 : vector<2x8xf32>
    %c0_46 = arith.constant 0 : index
    %c0_47 = arith.constant 0 : index
    %75 = vector.load %arg23[%c0_46, %c0_47] : memref<2x8xf32, #tpu.memory_space<vmem>>, vector<2x8xf32>
    tpu.vector_store %arg23[%c0_46, %c0_47], %67 {strides = array<i32>} : memref<2x8xf32, #tpu.memory_space<vmem>>, vector<2x8xf32>,
    %c0_48 = arith.constant 0 : index
    %c0_49 = arith.constant 0 : index
    %76 = vector.load %arg24[%c0_48, %c0_49] : memref<2x8xf32, #tpu.memory_space<vmem>>, vector<2x8xf32>
    tpu.vector_store %arg24[%c0_48, %c0_49], %68 {strides = array<i32>} : memref<2x8xf32, #tpu.memory_space<vmem>>, vector<2x8xf32>,
    %c0_50 = arith.constant 0 : index
    %c0_51 = arith.constant 0 : index
    %77 = vector.load %arg14[%c0_50, %c0_51] : memref<8x64xf32, #tpu.memory_space<vmem>>, vector<8x64xf32>
    %cst_52 = arith.constant dense<0.000000e+00> : vector<2x64xf32>
    %78 = tpu.matmul %74, %77, %cst_52 {dimension_numbers = #tpu.dot_dimension_numbers<[1], [0], [0], [1], [0, 0, 1, 1], [], []>} : vector<2x8xf32>, vector<8x64xf32>, vector<2x64xf32> -> vector<2x64xf32>
    %c0_53 = arith.constant 0 : index
    %c0_54 = arith.constant 0 : index
    %79 = vector.load %arg15[%c0_53, %c0_54] : memref<1x64xf32, #tpu.memory_space<vmem>>, vector<1x64xf32>
    %80 = vector.broadcast %79 : vector<1x64xf32> to vector<2x64xf32>
    %81 = arith.addf %78, %80 : vector<2x64xf32>
    %cst_55 = arith.constant 0.000000e+00 : f32
    %82 = vector.broadcast %cst_55 : f32 to vector<2x64xf32>
    %83 = arith.cmpf oge, %81, %82 : vector<2x64xf32>
    %cst_56 = arith.constant 0.00999999977 : f32
    %84 = vector.broadcast %cst_56 : f32 to vector<2x64xf32>
    %85 = arith.mulf %84, %81 : vector<2x64xf32>
    %86 = arith.select %83, %81, %85 : vector<2x64xi1>, vector<2x64xf32>
    %c0_57 = arith.constant 0 : index
    %c0_58 = arith.constant 0 : index
    %87 = vector.load %arg16[%c0_57, %c0_58] : memref<64x16xf32, #tpu.memory_space<vmem>>, vector<64x16xf32>
    %cst_59 = arith.constant dense<0.000000e+00> : vector<2x16xf32>
    %88 = tpu.matmul %86, %87, %cst_59 {dimension_numbers = #tpu.dot_dimension_numbers<[1], [0], [0], [1], [0, 0, 1, 1], [], []>} : vector<2x64xf32>, vector<64x16xf32>, vector<2x16xf32> -> vector<2x16xf32>
    %c0_60 = arith.constant 0 : index
    %c0_61 = arith.constant 0 : index
    %89 = vector.load %arg17[%c0_60, %c0_61] : memref<1x16xf32, #tpu.memory_space<vmem>>, vector<1x16xf32>
    %90 = vector.broadcast %89 : vector<1x16xf32> to vector<2x16xf32>
    %91 = arith.addf %88, %90 : vector<2x16xf32>
    %cst_62 = arith.constant 0.000000e+00 : f32
    %92 = vector.broadcast %cst_62 : f32 to vector<2x16xf32>
    %93 = arith.cmpf oge, %91, %92 : vector<2x16xf32>
    %cst_63 = arith.constant 0.00999999977 : f32
    %94 = vector.broadcast %cst_63 : f32 to vector<2x16xf32>
    %95 = arith.mulf %94, %91 : vector<2x16xf32>
    %96 = arith.select %93, %91, %95 : vector<2x16xi1>, vector<2x16xf32>
    %cst_64 = arith.constant 0.000000e+00 : f32
    %97 = vector.broadcast %cst_64 : f32 to vector<2x2xf32>
    %98 = tpu.concatenate %97, %96, %97 in 1 : vector<2x2xf32>, vector<2x16xf32>, vector<2x2xf32> -> vector<2x20xf32>
    %99 = vector.extract_strided_slice %98 {offsets = [0, 0], sizes = [2, 16], strides = [1, 1]} : vector<2x20xf32> to vector<2x16xf32>
    %100 = vector.extract_strided_slice %98 {offsets = [0, 1], sizes = [2, 16], strides = [1, 1]} : vector<2x20xf32> to vector<2x16xf32>
    %101 = vector.extract_strided_slice %98 {offsets = [0, 2], sizes = [2, 16], strides = [1, 1]} : vector<2x20xf32> to vector<2x16xf32>
    %102 = vector.extract_strided_slice %98 {offsets = [0, 3], sizes = [2, 16], strides = [1, 1]} : vector<2x20xf32> to vector<2x16xf32>
    %103 = vector.extract_strided_slice %98 {offsets = [0, 4], sizes = [2, 16], strides = [1, 1]} : vector<2x20xf32> to vector<2x16xf32>
    %104 = tpu.concatenate %99, %100, %101, %102, %103 in 0 : vector<2x16xf32>, vector<2x16xf32>, vector<2x16xf32>, vector<2x16xf32>, vector<2x16xf32> -> vector<10x16xf32>
    %c0_65 = arith.constant 0 : index
    %c0_66 = arith.constant 0 : index
    %105 = vector.load %arg18[%c0_65, %c0_66] : memref<32x10xf32, #tpu.memory_space<vmem>>, vector<32x10xf32>
    %cst_67 = arith.constant dense<0.000000e+00> : vector<32x16xf32>
    %106 = tpu.matmul %105, %104, %cst_67 {dimension_numbers = #tpu.dot_dimension_numbers<[1], [0], [0], [1], [0, 0, 1, 1], [], []>} : vector<32x10xf32>, vector<10x16xf32>, vector<32x16xf32> -> vector<32x16xf32>
    %c0_68 = arith.constant 0 : index
    %c0_69 = arith.constant 0 : index
    %107 = vector.load %arg19[%c0_68, %c0_69] : memref<32x1xf32, #tpu.memory_space<vmem>>, vector<32x1xf32>
    %108 = vector.broadcast %107 : vector<32x1xf32> to vector<32x16xf32>
    %109 = arith.addf %106, %108 : vector<32x16xf32>
    %cst_70 = arith.constant 0.000000e+00 : f32
    %110 = vector.broadcast %cst_70 : f32 to vector<32x16xf32>
    %111 = arith.cmpf oge, %109, %110 : vector<32x16xf32>
    %cst_71 = arith.constant 0.00999999977 : f32
    %112 = vector.broadcast %cst_71 : f32 to vector<32x16xf32>
    %113 = arith.mulf %112, %109 : vector<32x16xf32>
    %114 = arith.select %111, %109, %113 : vector<32x16xi1>, vector<32x16xf32>
    %cst_72 = arith.constant 0.000000e+00 : f32
    %115 = vector.broadcast %cst_72 : f32 to vector<32x1xf32>
    %116 = tpu.concatenate %115, %114, %115 in 1 : vector<32x1xf32>, vector<32x16xf32>, vector<32x1xf32> -> vector<32x18xf32>
    %117 = vector.extract_strided_slice %116 {offsets = [0, 0], sizes = [32, 16], strides = [1, 1]} : vector<32x18xf32> to vector<32x16xf32>
    %118 = vector.extract_strided_slice %116 {offsets = [0, 1], sizes = [32, 16], strides = [1, 1]} : vector<32x18xf32> to vector<32x16xf32>
    %119 = vector.extract_strided_slice %116 {offsets = [0, 2], sizes = [32, 16], strides = [1, 1]} : vector<32x18xf32> to vector<32x16xf32>
    %120 = tpu.concatenate %117, %118, %119 in 0 : vector<32x16xf32>, vector<32x16xf32>, vector<32x16xf32> -> vector<96x16xf32>
    %c0_73 = arith.constant 0 : index
    %c0_74 = arith.constant 0 : index
    %121 = vector.load %arg20[%c0_73, %c0_74] : memref<8x96xf32, #tpu.memory_space<vmem>>, vector<8x96xf32>
    %cst_75 = arith.constant dense<0.000000e+00> : vector<8x16xf32>
    %122 = tpu.matmul %121, %120, %cst_75 {dimension_numbers = #tpu.dot_dimension_numbers<[1], [0], [0], [1], [0, 0, 1, 1], [], []>} : vector<8x96xf32>, vector<96x16xf32>, vector<8x16xf32> -> vector<8x16xf32>
    %c0_76 = arith.constant 0 : index
    %c0_77 = arith.constant 0 : index
    %123 = vector.load %arg21[%c0_76, %c0_77] : memref<8x1xf32, #tpu.memory_space<vmem>>, vector<8x1xf32>
    %124 = vector.broadcast %123 : vector<8x1xf32> to vector<8x16xf32>
    %125 = arith.addf %122, %124 : vector<8x16xf32>
    %126 = math.tanh %125 : vector<8x16xf32>
    %c0_78 = arith.constant 0 : index
    %c0_79 = arith.constant 0 : index
    %127 = vector.load %arg22[%c0_78, %c0_79] : memref<8x16xf32, #tpu.memory_space<vmem>>, vector<8x16xf32>
    tpu.vector_store %arg22[%c0_78, %c0_79], %126 {strides = array<i32>} : memref<8x16xf32, #tpu.memory_space<vmem>>, vector<8x16xf32>,
    return
  }
}

</mosaic_0001>

<llo_original>
// kernel: vae_forward.1
$region0: #{vae_forward.1}
  #allocation0 [shape = 'u32[]', space=smem, size = 0x4, offset = 0x4, fixed_abs, tag = 'smem constant byte address 0x4 - core index']
  #allocation1 [shape = 'u32[72,128]{1,0:T(1,128)}', space=vmem, size = 0x9000, scoped, tag = 'internal scratch']
  %s0 = inlined_call_operand.vmem [shape: f32[2,4,16], index: 0, kind: input, shape index: {}]
  %s1 = inlined_call_operand.vmem [shape: f32[2,8], index: 1, kind: input, shape index: {}]
  %s2 = inlined_call_operand.vmem [shape: f32[16,20], index: 2, kind: input, shape index: {}]
  %s3 = inlined_call_operand.vmem [shape: f32[16,1], index: 3, kind: input, shape index: {}]
  %s4 = inlined_call_operand.vmem [shape: f32[40,22], index: 4, kind: input, shape index: {}]
  %s5 = inlined_call_operand.vmem [shape: f32[40,22], index: 5, kind: input, shape index: {}]
  %s6 = inlined_call_operand.vmem [shape: f32[32,48], index: 6, kind: input, shape index: {}]
  %s7 = inlined_call_operand.vmem [shape: f32[32,1], index: 7, kind: input, shape index: {}]
  %s8 = inlined_call_operand.vmem [shape: f32[20,8], index: 8, kind: input, shape index: {}]
  %s9 = inlined_call_operand.vmem [shape: f32[20,8], index: 9, kind: input, shape index: {}]
  %s10 = inlined_call_operand.vmem [shape: f32[128,64], index: 10, kind: input, shape index: {}]
  %s11 = inlined_call_operand.vmem [shape: f32[1,64], index: 11, kind: input, shape index: {}]
  %s12 = inlined_call_operand.vmem [shape: f32[64,16], index: 12, kind: input, shape index: {}]
  %s13 = inlined_call_operand.vmem [shape: f32[1,16], index: 13, kind: input, shape index: {}]
  %s14 = inlined_call_operand.vmem [shape: f32[8,64], index: 14, kind: input, shape index: {}]
  %s15 = inlined_call_operand.vmem [shape: f32[1,64], index: 15, kind: input, shape index: {}]
  %s16 = inlined_call_operand.vmem [shape: f32[64,16], index: 16, kind: input, shape index: {}]
  %s17 = inlined_call_operand.vmem [shape: f32[1,16], index: 17, kind: input, shape index: {}]
  %s18 = inlined_call_operand.vmem [shape: f32[32,10], index: 18, kind: input, shape index: {}]
  %s19 = inlined_call_operand.vmem [shape: f32[32,1], index: 19, kind: input, shape index: {}]
  %s20 = inlined_call_operand.vmem [shape: f32[8,96], index: 20, kind: input, shape index: {}]
  %s21 = inlined_call_operand.vmem [shape: f32[8,1], index: 21, kind: input, shape index: {}]
  %s22 = inlined_call_operand.hbm [shape: f32[8,16], index: 22, kind: output, shape index: {0}]
  %s23 = inlined_call_operand.hbm [shape: f32[2,8], index: 23, kind: output, shape index: {1}]
  %s24 = inlined_call_operand.hbm [shape: f32[2,8], index: 24, kind: output, shape index: {2}]
  %25 = xla_tuple %s22, %s23, %s24
  %s26 = sld [smem:[#allocation0]]
  $region114: #{vae_forward.1} parent=0
    _
  %s28 = ssub.s32 1, %s26
  %s29 = scalar_select 0, %s28, %s26
  $region1: #{vae_forward.1} parent=0
    #allocation2 [shape = 'u8[4096]{0}', space=vmem, size = 0x1000, scoped, tag = 'output window, operand 0, single buffered']
    #allocation3 [shape = 's32[1]{0}', space=sflag, size = 0x4, scoped, tag = 'scoped memory for vae_forward.1']
    #allocation4 [shape = 'u8[1024]{0}', space=vmem, size = 0x400, scoped, tag = 'output window, operand 1, single buffered']
    #allocation5 [shape = 's32[1]{0}', space=sflag, size = 0x4, scoped, tag = 'scoped memory for vae_forward.1']
    #allocation6 [shape = 'u8[1024]{0}', space=vmem, size = 0x400, scoped, tag = 'output window, operand 2, single buffered']
    %30 = vsyncpa [#allocation3], 0
    %31 = vsyncpa [#allocation5], 0
    // Predicated region
    $region2: #{vae_forward.1} parent=1 // pred_check
      _
    $region3: #{vae_forward.1} parent=1 // pred_check_branch
      %33 = sbr.rel (0) target = $region5
    $region4: #{vae_forward.1} parent=1 // pred_region
      _
    $region5: #{vae_forward.1} parent=1 // pred_fallthru
      _
    // Predicated region
    $region6: #{vae_forward.1} parent=1 // pred_check
      _
    $region7: #{vae_forward.1} parent=1 // pred_check_branch
      %35 = sbr.rel (0) target = $region9
    $region8: #{vae_forward.1} parent=1 // pred_region
      _
    $region9: #{vae_forward.1} parent=1 // pred_fallthru
      _
    // Predicated region
    $region10: #{vae_forward.1} parent=1 // pred_check
      _
    $region11: #{vae_forward.1} parent=1 // pred_check_branch
      %37 = sbr.rel (0) target = $region13
    $region12: #{vae_forward.1} parent=1 // pred_region
      _
    $region13: #{vae_forward.1} parent=1 // pred_fallthru
      _
    // Predicated region
    $region14: #{vae_forward.1} parent=1 // pred_check
      _
    $region15: #{vae_forward.1} parent=1 // pred_check_branch
      %39 = sbr.rel (0) target = $region17
    $region16: #{vae_forward.1} parent=1 // pred_region
      _
    $region17: #{vae_forward.1} parent=1 // pred_fallthru
      _
    // Predicated region
    $region18: #{vae_forward.1} parent=1 // pred_check
      _
    $region19: #{vae_forward.1} parent=1 // pred_check_branch
      %41 = sbr.rel (0) target = $region21
    $region20: #{vae_forward.1} parent=1 // pred_region
      _
    $region21: #{vae_forward.1} parent=1 // pred_fallthru
      _
    // Predicated region
    $region22: #{vae_forward.1} parent=1 // pred_check
      _
    $region23: #{vae_forward.1} parent=1 // pred_check_branch
      %43 = sbr.rel (0) target = $region25
    $region24: #{vae_forward.1} parent=1 // pred_region
      _
    $region25: #{vae_forward.1} parent=1 // pred_fallthru
      _
    // Predicated region
    $region26: #{vae_forward.1} parent=1 // pred_check
      _
    $region27: #{vae_forward.1} parent=1 // pred_check_branch
      %45 = sbr.rel (0) target = $region29
    $region28: #{vae_forward.1} parent=1 // pred_region
      _
    $region29: #{vae_forward.1} parent=1 // pred_fallthru
      _
    // Predicated region
    $region30: #{vae_forward.1} parent=1 // pred_check
      _
    $region31: #{vae_forward.1} parent=1 // pred_check_branch
      %47 = sbr.rel (0) target = $region33
    $region32: #{vae_forward.1} parent=1 // pred_region
      _
    $region33: #{vae_forward.1} parent=1 // pred_fallthru
      _
    // Predicated region
    $region34: #{vae_forward.1} parent=1 // pred_check
      _
    $region35: #{vae_forward.1} parent=1 // pred_check_branch
      %49 = sbr.rel (0) target = $region37
    $region36: #{vae_forward.1} parent=1 // pred_region
      _
    $region37: #{vae_forward.1} parent=1 // pred_fallthru
      _
    // Predicated region
    $region38: #{vae_forward.1} parent=1 // pred_check
      _
    $region39: #{vae_forward.1} parent=1 // pred_check_branch
      %51 = sbr.rel (0) target = $region41
    $region40: #{vae_forward.1} parent=1 // pred_region
      _
    $region41: #{vae_forward.1} parent=1 // pred_fallthru
      _
    // Predicated region
    $region42: #{vae_forward.1} parent=1 // pred_check
      _
    $region43: #{vae_forward.1} parent=1 // pred_check_branch
      %53 = sbr.rel (0) target = $region45
    $region44: #{vae_forward.1} parent=1 // pred_region
      _
    $region45: #{vae_forward.1} parent=1 // pred_fallthru
      _
    // Predicated region
    $region46: #{vae_forward.1} parent=1 // pred_check
      _
    $region47: #{vae_forward.1} parent=1 // pred_check_branch
      %55 = sbr.rel (0) target = $region49
    $region48: #{vae_forward.1} parent=1 // pred_region
      _
    $region49: #{vae_forward.1} parent=1 // pred_fallthru
      _
    // Predicated region
    $region50: #{vae_forward.1} parent=1 // pred_check
      _
    $region51: #{vae_forward.1} parent=1 // pred_check_branch
      %57 = sbr.rel (0) target = $region53
    $region52: #{vae_forward.1} parent=1 // pred_region
      _
    $region53: #{vae_forward.1} parent=1 // pred_fallthru
      _
    // Predicated region
    $region54: #{vae_forward.1} parent=1 // pred_check
      _
    $region55: #{vae_forward.1} parent=1 // pred_check_branch
      %59 = sbr.rel (0) target = $region57
    $region56: #{vae_forward.1} parent=1 // pred_region
      _
    $region57: #{vae_forward.1} parent=1 // pred_fallthru
      _
    // Predicated region
    $region58: #{vae_forward.1} parent=1 // pred_check
      _
    $region59: #{vae_forward.1} parent=1 // pred_check_branch
      %61 = sbr.rel (0) target = $region61
    $region60: #{vae_forward.1} parent=1 // pred_region
      _
    $region61: #{vae_forward.1} parent=1 // pred_fallthru
      _
    // Predicated region
    $region62: #{vae_forward.1} parent=1 // pred_check
      _
    $region63: #{vae_forward.1} parent=1 // pred_check_branch
      %63 = sbr.rel (0) target = $region65
    $region64: #{vae_forward.1} parent=1 // pred_region
      _
    $region65: #{vae_forward.1} parent=1 // pred_fallthru
      _
    // Predicated region
    $region66: #{vae_forward.1} parent=1 // pred_check
      _
    $region67: #{vae_forward.1} parent=1 // pred_check_branch
      %65 = sbr.rel (0) target = $region69
    $region68: #{vae_forward.1} parent=1 // pred_region
      _
    $region69: #{vae_forward.1} parent=1 // pred_fallthru
      _
    // Predicated region
    $region70: #{vae_forward.1} parent=1 // pred_check
      _
    $region71: #{vae_forward.1} parent=1 // pred_check_branch
      %67 = sbr.rel (0) target = $region73
    $region72: #{vae_forward.1} parent=1 // pred_region
      _
    $region73: #{vae_forward.1} parent=1 // pred_fallthru
      _
    // Predicated region
    $region74: #{vae_forward.1} parent=1 // pred_check
      _
    $region75: #{vae_forward.1} parent=1 // pred_check_branch
      %69 = sbr.rel (0) target = $region77
    $region76: #{vae_forward.1} parent=1 // pred_region
      _
    $region77: #{vae_forward.1} parent=1 // pred_fallthru
      _
    // Predicated region
    $region78: #{vae_forward.1} parent=1 // pred_check
      _
    $region79: #{vae_forward.1} parent=1 // pred_check_branch
      %71 = sbr.rel (0) target = $region81
    $region80: #{vae_forward.1} parent=1 // pred_region
      _
    $region81: #{vae_forward.1} parent=1 // pred_fallthru
      _
    // Predicated region
    $region82: #{vae_forward.1} parent=1 // pred_check
      _
    $region83: #{vae_forward.1} parent=1 // pred_check_branch
      %73 = sbr.rel (0) target = $region85
    $region84: #{vae_forward.1} parent=1 // pred_region
      _
    $region85: #{vae_forward.1} parent=1 // pred_fallthru
      _
    // Predicated region
    $region86: #{vae_forward.1} parent=1 // pred_check
      _
    $region87: #{vae_forward.1} parent=1 // pred_check_branch
      %75 = sbr.rel (0) target = $region89
    $region88: #{vae_forward.1} parent=1 // pred_region
      _
    $region89: #{vae_forward.1} parent=1 // pred_fallthru
      _
    %v76 = vld [vmem:[%s0] sm:$0xf]
    %s77 = scalar_lea.vmem %s0, 4
    %v78 = vld [vmem:[%s77] sm:$0xf]
    %80 = vrot.lane.b32.xlu0 %v76, 2
    %v81 = vpop.permute.xlu0 %80
    %84 = vrot.lane.b32.xlu0 %v78, 22
    %v85 = vpop.permute.xlu0 %84
    %vm87 = vcmask 15360
    %v88 = vsel %vm87, 0.0, %v81
    %vm89 = vcmask 146432
    %v90 = vsel %vm89, %v88, 0.0
    %vm91 = vcmask 162816
    %v92 = vsel %vm91, %v90, 0.0
    %vm93 = vcmask 179200
    %v94 = vsel %vm93, %v92, %v85
    %vm95 = vcmask 310272
    %v96 = vsel %vm95, %v94, 0.0
    %vm97 = vcmask 326656
    %v98 = vsel %vm97, %v96, 0.0
    %v100 = vrot.slane %v98, 4
    %101 = vrot.lane.b32.xlu0 %v100, 127
    %v102 = vpop.permute.xlu0 %101
    %104 = vrot.lane.b32.xlu0 %v98, 126
    %v105 = vpop.permute.xlu0 %104
    %107 = vrot.lane.b32.xlu0 %v100, 125
    %v108 = vpop.permute.xlu0 %107
    %110 = vrot.lane.b32.xlu0 %v98, 124
    %v111 = vpop.permute.xlu0 %110
    %vm112 = vcmask 1043456
    %v113 = vsel %vm112, %v98, %v102
    %v114 = vsel %vm112, %v105, %v108
    %v115 = vld [vmem:[%s2] sm:$0xff]
    %v116 = vld [vmem:[%s2 + $0x8] sm:$0xff]
    %v117 = vld [vmem:[%s3] sm:$0xff]
    %v118 = vld [vmem:[%s3 + $0x8] sm:$0xff]
    %120 = vset.pattern.permute.xlu0 0
    %121 = vperm.xlu0 %120, %v117
    %v122 = vpop.permute.xlu0 %121
    %125 = vset.pattern.permute.xlu0 0
    %126 = vperm.xlu0 %125, %v118
    %v127 = vpop.permute.xlu0 %126
    %v130 = vsel %vm91, %v115, 0
    %v133 = vsel %vm91, %v116, 0
    %v135 = vsel %vm112, %v111, 0
    %137 = vmatpush.msra.mxu0 0.0
    %138 = vmatpush.msra.mxu0 0.0
    %139 = vmatpush.msra.mxu0 0.0
    %140 = vmatpush.msra.mxu0 0.0
    %141 = vmatpush.msra.mxu0 0.0
    %142 = vmatpush.msra.mxu0 0.0
    %143 = vmatpush.msra.mxu0 0.0
    %144 = vmatpush.msra.mxu0 0.0
    %145 = vmatpush.msra.mxu0 0.0
    %146 = vmatpush.msra.mxu0 0.0
    %147 = vmatpush.msra.mxu0 0.0
    %148 = vmatpush.msra.mxu0 0.0
    %149 = vmatpush.msra.mxu0 0.0
    %150 = vmatpush.msra.mxu0 %v135
    %151 = vmatpush.msra.mxu0 %v114
    %152 = vmatpush.msra.mxu0 %v113
    %153 = vmatmul.f32.gmra.mxu0 %v130
    %v154 = vpop.f32.mrf.mxu0
    %v155 = vadd.f32 %v122, %v154
    %156 = vmatmul.f32.gmra.mxu0 %v133
    %v157 = vpop.f32.mrf.mxu0
    %v158 = vadd.f32 %v127, %v157
    %159 = vdwg.mxu0
    %vm160 = vcmp.ge.f32.partialorder %v155, 0.0
    %vm161 = vcmp.ge.f32.partialorder %v158, 0.0
    %v162 = vmul.f32 %v155, 0.01
    %v163 = vmul.f32 %v158, 0.01
    %v164 = vsel %vm160, %v155, %v162
    %v165 = vsel %vm161, %v158, %v163
    %v166 = vld [vmem:[%s4] sm:$0xff]
    %v167 = vld [vmem:[%s4 + $0x8] sm:$0xff]
    %v168 = vld [vmem:[%s4 + $0x10] sm:$0xff]
    %v169 = vld [vmem:[%s4 + $0x18] sm:$0xff]
    %v170 = vld [vmem:[%s4 + $0x20] sm:$0xff]
    %v172 = vsel %vm97, %v164, 0
    %v175 = vsel %vm97, %v165, 0
    %177 = vmatpush.msra.mxu0 0.0
    %178 = vmatpush.msra.mxu0 0.0
    %179 = vmatpush.msra.mxu0 0.0
    %180 = vmatpush.msra.mxu0 0.0
    %181 = vmatpush.msra.mxu0 0.0
    %182 = vmatpush.msra.mxu0 0.0
    %183 = vmatpush.msra.mxu0 0.0
    %184 = vmatpush.msra.mxu0 0.0
    %185 = vmatpush.msra.mxu0 0.0
    %186 = vmatpush.msra.mxu0 0.0
    %187 = vmatpush.msra.mxu0 0.0
    %188 = vmatpush.msra.mxu0 %v170
    %189 = vmatpush.msra.mxu0 %v169
    %190 = vmatpush.msra.mxu0 %v168
    %191 = vmatpush.msra.mxu0 %v167
    %192 = vmatpush.msra.mxu0 %v166
    %193 = vmatmul.f32.gmra.mxu0 %v172
    %v194 = vpop.f32.mrf.mxu0
    %v195 = vadd.f32 0.0, %v194
    %196 = vmatmul.f32.gmra.mxu0 %v175
    %v197 = vpop.f32.mrf.mxu0
    %v198 = vadd.f32 0.0, %v197
    %199 = vdwg.mxu0
    %v200 = vld [vmem:[%s5] sm:$0xff]
    %v201 = vld [vmem:[%s5 + $0x8] sm:$0xff]
    %v202 = vld [vmem:[%s5 + $0x10] sm:$0xff]
    %v203 = vld [vmem:[%s5 + $0x18] sm:$0xff]
    %v204 = vld [vmem:[%s5 + $0x20] sm:$0xff]
    %205 = vmatpush.msra.mxu0 0.0
    %206 = vmatpush.msra.mxu0 0.0
    %207 = vmatpush.msra.mxu0 0.0
    %208 = vmatpush.msra.mxu0 0.0
    %209 = vmatpush.msra.mxu0 0.0
    %210 = vmatpush.msra.mxu0 0.0
    %211 = vmatpush.msra.mxu0 0.0
    %212 = vmatpush.msra.mxu0 0.0
    %213 = vmatpush.msra.mxu0 0.0
    %214 = vmatpush.msra.mxu0 0.0
    %215 = vmatpush.msra.mxu0 0.0
    %216 = vmatpush.msra.mxu0 %v204
    %217 = vmatpush.msra.mxu0 %v203
    %218 = vmatpush.msra.mxu0 %v202
    %219 = vmatpush.msra.mxu0 %v201
    %220 = vmatpush.msra.mxu0 %v200
    %221 = vmatmul.f32.gmra.mxu0 %v172
    %v222 = vpop.f32.mrf.mxu0
    %v223 = vadd.f32 0.0, %v222
    %224 = vmatmul.f32.gmra.mxu0 %v175
    %v225 = vpop.f32.mrf.mxu0
    %v226 = vadd.f32 0.0, %v225
    %227 = vdwg.mxu0
    %v228 = vmax.f32 %v195, %v223
    %v229 = vmax.f32 %v198, %v226
    %232 = vrot.lane.b32.xlu0 %v228, 127
    %v233 = vpop.permute.xlu0 %232
    %234 = vrot.lane.b32.xlu0 %v229, 127
    %v235 = vpop.permute.xlu0 %234
    %238 = vrot.lane.b32.xlu0 %v228, 126
    %v239 = vpop.permute.xlu0 %238
    %240 = vrot.lane.b32.xlu0 %v229, 126
    %v241 = vpop.permute.xlu0 %240
    %v244 = vld [vmem:[%s6] sm:$0xff]
    %v245 = vld [vmem:[%s6 + $0x8] sm:$0xff]
    %v246 = vld [vmem:[%s6 + $0x10] sm:$0xff]
    %v247 = vld [vmem:[%s6 + $0x18] sm:$0xff]
    %v248 = vld [vmem:[%s7] sm:$0xff]
    %v249 = vld [vmem:[%s7 + $0x8] sm:$0xff]
    %v250 = vld [vmem:[%s7 + $0x10] sm:$0xff]
    %v251 = vld [vmem:[%s7 + $0x18] sm:$0xff]
    %253 = vset.pattern.permute.xlu0 0
    %254 = vperm.xlu0 %253, %v248
    %v255 = vpop.permute.xlu0 %254
    %258 = vset.pattern.permute.xlu0 0
    %259 = vperm.xlu0 %258, %v249
    %v260 = vpop.permute.xlu0 %259
    %263 = vset.pattern.permute.xlu0 0
    %264 = vperm.xlu0 %263, %v250
    %v265 = vpop.permute.xlu0 %264
    %268 = vset.pattern.permute.xlu0 0
    %269 = vperm.xlu0 %268, %v251
    %v270 = vpop.permute.xlu0 %269
    %vm272 = vcmask 392192
    %v274 = vsel %vm272, %v244, 0
    %v277 = vsel %vm272, %v245, 0
    %v280 = vsel %vm272, %v246, 0
    %v283 = vsel %vm272, %v247, 0
    %285 = vmatpush.msra.mxu0 0.0
    %286 = vmatpush.msra.mxu0 0.0
    %287 = vmatpush.msra.mxu0 0.0
    %288 = vmatpush.msra.mxu0 0.0
    %289 = vmatpush.msra.mxu0 0.0
    %290 = vmatpush.msra.mxu0 0.0
    %291 = vmatpush.msra.mxu0 0.0
    %292 = vmatpush.msra.mxu0 0.0
    %293 = vmatpush.msra.mxu0 0.0
    %294 = vmatpush.msra.mxu0 0.0
    %295 = vmatpush.msra.mxu0 %v241
    %296 = vmatpush.msra.mxu0 %v239
    %297 = vmatpush.msra.mxu0 %v235
    %298 = vmatpush.msra.mxu0 %v233
    %299 = vmatpush.msra.mxu0 %v229
    %300 = vmatpush.msra.mxu0 %v228
    %301 = vmatmul.f32.gmra.mxu0 %v274
    %v302 = vpop.f32.mrf.mxu0
    %v303 = vadd.f32 %v255, %v302
    %304 = vmatmul.f32.gmra.mxu0 %v277
    %v305 = vpop.f32.mrf.mxu0
    %v306 = vadd.f32 %v260, %v305
    %307 = vmatmul.f32.gmra.mxu0 %v280
    %v308 = vpop.f32.mrf.mxu0
    %v309 = vadd.f32 %v265, %v308
    %310 = vmatmul.f32.gmra.mxu0 %v283
    %v311 = vpop.f32.mrf.mxu0
    %v312 = vadd.f32 %v270, %v311
    %313 = vdwg.mxu0
    %vm314 = vcmp.ge.f32.partialorder %v303, 0.0
    %vm315 = vcmp.ge.f32.partialorder %v306, 0.0
    %vm316 = vcmp.ge.f32.partialorder %v309, 0.0
    %vm317 = vcmp.ge.f32.partialorder %v312, 0.0
    %v318 = vmul.f32 %v303, 0.01
    %v319 = vmul.f32 %v306, 0.01
    %v320 = vmul.f32 %v309, 0.01
    %v321 = vmul.f32 %v312, 0.01
    %v322 = vsel %vm314, %v303, %v318
    %v323 = vsel %vm315, %v306, %v319
    %v324 = vsel %vm316, %v309, %v320
    %v325 = vsel %vm317, %v312, %v321
    %v326 = vld [vmem:[%s8] sm:$0xff]
    %v327 = vld [vmem:[%s8 + $0x8] sm:$0xff]
    %v328 = vld [vmem:[%s8 + $0x10] sm:$0xf]
    %v330 = vsel %vm91, %v322, 0
    %v333 = vsel %vm91, %v323, 0
    %v336 = vsel %vm91, %v324, 0
    %v339 = vsel %vm91, %v325, 0
    %v342 = vsel %vm112, %v328, 0
    %344 = vmatpush.msra.mxu0 0.0
    %345 = vmatpush.msra.mxu0 0.0
    %346 = vmatpush.msra.mxu0 0.0
    %347 = vmatpush.msra.mxu0 0.0
    %348 = vmatpush.msra.mxu0 0.0
    %349 = vmatpush.msra.mxu0 0.0
    %350 = vmatpush.msra.mxu0 0.0
    %351 = vmatpush.msra.mxu0 0.0
    %352 = vmatpush.msra.mxu0 0.0
    %353 = vmatpush.msra.mxu0 0.0
    %354 = vmatpush.msra.mxu0 0.0
    %355 = vmatpush.msra.mxu0 0.0
    %356 = vmatpush.msra.mxu0 0.0
    %357 = vmatpush.msra.mxu0 %v342
    %358 = vmatpush.msra.mxu0 %v327
    %359 = vmatpush.msra.mxu0 %v326
    %360 = vmatmul.f32.gmra.mxu0 %v330
    %v361 = vpop.f32.mrf.mxu0
    %v362 = vadd.f32 0.0, %v361
    %363 = vmatmul.f32.gmra.mxu0 %v333
    %v364 = vpop.f32.mrf.mxu0
    %v365 = vadd.f32 0.0, %v364
    %366 = vmatmul.f32.gmra.mxu0 %v336
    %v367 = vpop.f32.mrf.mxu0
    %v368 = vadd.f32 0.0, %v367
    %369 = vmatmul.f32.gmra.mxu0 %v339
    %v370 = vpop.f32.mrf.mxu0
    %v371 = vadd.f32 0.0, %v370
    %372 = vdwg.mxu0
    %v373 = vld [vmem:[%s9] sm:$0xff]
    %v374 = vld [vmem:[%s9 + $0x8] sm:$0xff]
    %v375 = vld [vmem:[%s9 + $0x10] sm:$0xf]
    %v377 = vsel %vm112, %v375, 0
    %379 = vmatpush.msra.mxu0 0.0
    %380 = vmatpush.msra.mxu0 0.0
    %381 = vmatpush.msra.mxu0 0.0
    %382 = vmatpush.msra.mxu0 0.0
    %383 = vmatpush.msra.mxu0 0.0
    %384 = vmatpush.msra.mxu0 0.0
    %385 = vmatpush.msra.mxu0 0.0
    %386 = vmatpush.msra.mxu0 0.0
    %387 = vmatpush.msra.mxu0 0.0
    %388 = vmatpush.msra.mxu0 0.0
    %389 = vmatpush.msra.mxu0 0.0
    %390 = vmatpush.msra.mxu0 0.0
    %391 = vmatpush.msra.mxu0 0.0
    %392 = vmatpush.msra.mxu0 %v377
    %393 = vmatpush.msra.mxu0 %v374
    %394 = vmatpush.msra.mxu0 %v373
    %395 = vmatmul.f32.gmra.mxu0 %v330
    %v396 = vpop.f32.mrf.mxu0
    %v397 = vadd.f32 0.0, %v396
    %398 = vmatmul.f32.gmra.mxu0 %v333
    %v399 = vpop.f32.mrf.mxu0
    %v400 = vadd.f32 0.0, %v399
    %401 = vmatmul.f32.gmra.mxu0 %v336
    %v402 = vpop.f32.mrf.mxu0
    %v403 = vadd.f32 0.0, %v402
    %404 = vmatmul.f32.gmra.mxu0 %v339
    %v405 = vpop.f32.mrf.mxu0
    %v406 = vadd.f32 0.0, %v405
    %407 = vdwg.mxu0
    %v408 = vmax.f32 %v362, %v397
    %v409 = vmax.f32 %v365, %v400
    %v410 = vmax.f32 %v368, %v403
    %v411 = vmax.f32 %v371, %v406
    %416 = vrot.lane.b32.xlu0 %v408, 126
    %v417 = vpop.permute.xlu0 %416
    %418 = vrot.lane.b32.xlu0 %v409, 126
    %v419 = vpop.permute.xlu0 %418
    %420 = vrot.lane.b32.xlu0 %v410, 126
    %v421 = vpop.permute.xlu0 %420
    %422 = vrot.lane.b32.xlu0 %v411, 126
    %v423 = vpop.permute.xlu0 %422
    %428 = vrot.lane.b32.xlu0 %v408, 124
    %v429 = vpop.permute.xlu0 %428
    %430 = vrot.lane.b32.xlu0 %v409, 124
    %v431 = vpop.permute.xlu0 %430
    %432 = vrot.lane.b32.xlu0 %v410, 124
    %v433 = vpop.permute.xlu0 %432
    %434 = vrot.lane.b32.xlu0 %v411, 124
    %v435 = vpop.permute.xlu0 %434
    %440 = vrot.lane.b32.xlu0 %v408, 122
    %v441 = vpop.permute.xlu0 %440
    %442 = vrot.lane.b32.xlu0 %v409, 122
    %v443 = vpop.permute.xlu0 %442
    %444 = vrot.lane.b32.xlu0 %v410, 122
    %v445 = vpop.permute.xlu0 %444
    %446 = vrot.lane.b32.xlu0 %v411, 122
    %v447 = vpop.permute.xlu0 %446
    %v452 = vld [vmem:[%s10] sm:$0xff]
    %v453 = vld [vmem:[%s10 + $0x8] sm:$0xff]
    %v454 = vld [vmem:[%s10 + $0x10] sm:$0xff]
    %v455 = vld [vmem:[%s10 + $0x18] sm:$0xff]
    %v456 = vld [vmem:[%s10 + $0x20] sm:$0xff]
    %v457 = vld [vmem:[%s10 + $0x28] sm:$0xff]
    %v458 = vld [vmem:[%s10 + $0x30] sm:$0xff]
    %v459 = vld [vmem:[%s10 + $0x38] sm:$0xff]
    %v460 = vld [vmem:[%s10 + $0x40] sm:$0xff]
    %v461 = vld [vmem:[%s10 + $0x48] sm:$0xff]
    %v462 = vld [vmem:[%s10 + $0x50] sm:$0xff]
    %v463 = vld [vmem:[%s10 + $0x58] sm:$0xff]
    %v464 = vld [vmem:[%s10 + $0x60] sm:$0xff]
    %v465 = vld [vmem:[%s10 + $0x68] sm:$0xff]
    %v466 = vld [vmem:[%s10 + $0x70] sm:$0xff]
    %v467 = vld [vmem:[%s10 + $0x78] sm:$0xff]
    %v468 = vld [vmem:[%s11] sm:$0x1]
    %v470 = vperm.slane %v468, 0
    %472 = vxpose.xlu0.b32.start [1/16] %v408, 128
    %473 = vxpose.xlu0.b32.cont [2/16] %v409, 128
    %474 = vxpose.xlu0.b32.cont [3/16] %v410, 128
    %475 = vxpose.xlu0.b32.cont [4/16] %v411, 128
    %476 = vxpose.xlu0.b32.cont [5/16] %v417, 128
    %477 = vxpose.xlu0.b32.cont [6/16] %v419, 128
    %478 = vxpose.xlu0.b32.cont [7/16] %v421, 128
    %479 = vxpose.xlu0.b32.cont [8/16] %v423, 128
    %480 = vxpose.xlu0.b32.cont [9/16] %v429, 128
    %481 = vxpose.xlu0.b32.cont [10/16] %v431, 128
    %482 = vxpose.xlu0.b32.cont [11/16] %v433, 128
    %483 = vxpose.xlu0.b32.cont [12/16] %v435, 128
    %484 = vxpose.xlu0.b32.cont [13/16] %v441, 128
    %485 = vxpose.xlu0.b32.cont [14/16] %v443, 128
    %486 = vxpose.xlu0.b32.cont [15/16] %v445, 128
    %487 = vxpose.xlu0.b32.end [16/16] %v447, 128
    %v488 = vpop.trf.xlu0
    %v489 = vpop.trf.xlu0
    %v490 = vpop.trf.xlu0
    %v491 = vpop.trf.xlu0
    %v492 = vpop.trf.xlu0
    %v493 = vpop.trf.xlu0
    %v494 = vpop.trf.xlu0
    %v495 = vpop.trf.xlu0
    %v496 = vpop.trf.xlu0
    %v497 = vpop.trf.xlu0
    %v498 = vpop.trf.xlu0
    %v499 = vpop.trf.xlu0
    %v500 = vpop.trf.xlu0
    %v501 = vpop.trf.xlu0
    %v502 = vpop.trf.xlu0
    %v503 = vpop.trf.xlu0
    %504 = vmatpush.msra.mxu0 %v467
    %505 = vmatpush.msra.mxu0 %v466
    %506 = vmatpush.msra.mxu0 %v465
    %507 = vmatpush.msra.mxu0 %v464
    %508 = vmatpush.msra.mxu0 %v463
    %509 = vmatpush.msra.mxu0 %v462
    %510 = vmatpush.msra.mxu0 %v461
    %511 = vmatpush.msra.mxu0 %v460
    %512 = vmatpush.msra.mxu0 %v459
    %513 = vmatpush.msra.mxu0 %v458
    %514 = vmatpush.msra.mxu0 %v457
    %515 = vmatpush.msra.mxu0 %v456
    %516 = vmatpush.msra.mxu0 %v455
    %517 = vmatpush.msra.mxu0 %v454
    %518 = vmatpush.msra.mxu0 %v453
    %519 = vmatpush.msra.mxu0 %v452
    %520 = vmatmul.f32.gmra.mxu0 %v488
    %v521 = vpop.f32.mrf.mxu0
    %v522 = vadd.f32 %v470, %v521
    %523 = vdwg.mxu0
    %vm524 = vcmp.ge.f32.partialorder %v522, 0.0
    %v525 = vmul.f32 %v522, 0.01
    %v526 = vsel %vm524, %v522, %v525
    %v527 = vld [vmem:[%s12] sm:$0xff]
    %v528 = vld [vmem:[%s12 + $0x8] sm:$0xff]
    %v529 = vld [vmem:[%s12 + $0x10] sm:$0xff]
    %v530 = vld [vmem:[%s12 + $0x18] sm:$0xff]
    %v531 = vld [vmem:[%s12 + $0x20] sm:$0xff]
    %v532 = vld [vmem:[%s12 + $0x28] sm:$0xff]
    %v533 = vld [vmem:[%s12 + $0x30] sm:$0xff]
    %v534 = vld [vmem:[%s12 + $0x38] sm:$0xff]
    %v535 = vld [vmem:[%s13] sm:$0x1]
    %v537 = vperm.slane %v535, 0
    %vm539 = vcmask 523264
    %v541 = vsel %vm539, %v526, 0
    %543 = vmatpush.msra.mxu0 0.0
    %544 = vmatpush.msra.mxu0 0.0
    %545 = vmatpush.msra.mxu0 0.0
    %546 = vmatpush.msra.mxu0 0.0
    %547 = vmatpush.msra.mxu0 0.0
    %548 = vmatpush.msra.mxu0 0.0
    %549 = vmatpush.msra.mxu0 0.0
    %550 = vmatpush.msra.mxu0 0.0
    %551 = vmatpush.msra.mxu0 %v534
    %552 = vmatpush.msra.mxu0 %v533
    %553 = vmatpush.msra.mxu0 %v532
    %554 = vmatpush.msra.mxu0 %v531
    %555 = vmatpush.msra.mxu0 %v530
    %556 = vmatpush.msra.mxu0 %v529
    %557 = vmatpush.msra.mxu0 %v528
    %558 = vmatpush.msra.mxu0 %v527
    %559 = vmatmul.f32.gmra.mxu0 %v541
    %v560 = vpop.f32.mrf.mxu0
    %v561 = vadd.f32 %v537, %v560
    %562 = vdwg.mxu0
    %v563 = vld [vmem:[%s1] sm:$0x3]
    %v564 = vmul.f32 %v561, 0.5
    %v565 = vmul.f32 %v564, 1.442695
    %v566 = vpow.pop %v565
    %568 = vrot.lane.b32.xlu0 %v566, 120
    %v569 = vpop.permute.xlu0 %568
    %v571 = vmul.f32 %v563, %v569
    %v572 = vadd.f32 %v561, %v571
    %vm573 = vcmask 58368
    %574 = vst.msk [vmem:[#allocation4] sm:$0x3] %vm573, %v561
    %576 = vrot.lane.b32.xlu0 %v561, 120
    %v577 = vpop.permute.xlu0 %576
    %579 = vst.msk [vmem:[#allocation6] sm:$0x3] %vm573, %v577
    %v580 = vld [vmem:[%s14] sm:$0xff]
    %v581 = vld [vmem:[%s15] sm:$0x1]
    %v583 = vperm.slane %v581, 0
    %vm585 = vcmask 64512
    %v587 = vsel %vm585, %v572, 0
    %589 = vmatpush.msra.mxu0 0.0
    %590 = vmatpush.msra.mxu0 0.0
    %591 = vmatpush.msra.mxu0 0.0
    %592 = vmatpush.msra.mxu0 0.0
    %593 = vmatpush.msra.mxu0 0.0
    %594 = vmatpush.msra.mxu0 0.0
    %595 = vmatpush.msra.mxu0 0.0
    %596 = vmatpush.msra.mxu0 0.0
    %597 = vmatpush.msra.mxu0 0.0
    %598 = vmatpush.msra.mxu0 0.0
    %599 = vmatpush.msra.mxu0 0.0
    %600 = vmatpush.msra.mxu0 0.0
    %601 = vmatpush.msra.mxu0 0.0
    %602 = vmatpush.msra.mxu0 0.0
    %603 = vmatpush.msra.mxu0 0.0
    %604 = vmatpush.msra.mxu0 %v580
    %605 = vmatmul.f32.gmra.mxu0 %v587
    %v606 = vpop.f32.mrf.mxu0
    %v607 = vadd.f32 %v583, %v606
    %608 = vdwg.mxu0
    %vm609 = vcmp.ge.f32.partialorder %v607, 0.0
    %v610 = vmul.f32 %v607, 0.01
    %v611 = vsel %vm609, %v607, %v610
    %v612 = vld [vmem:[%s16] sm:$0xff]
    %v613 = vld [vmem:[%s16 + $0x8] sm:$0xff]
    %v614 = vld [vmem:[%s16 + $0x10] sm:$0xff]
    %v615 = vld [vmem:[%s16 + $0x18] sm:$0xff]
    %v616 = vld [vmem:[%s16 + $0x20] sm:$0xff]
    %v617 = vld [vmem:[%s16 + $0x28] sm:$0xff]
    %v618 = vld [vmem:[%s16 + $0x30] sm:$0xff]
    %v619 = vld [vmem:[%s16 + $0x38] sm:$0xff]
    %v620 = vld [vmem:[%s17] sm:$0x1]
    %v622 = vperm.slane %v620, 0
    %v625 = vsel %vm539, %v611, 0
    %627 = vmatpush.msra.mxu0 0.0
    %628 = vmatpush.msra.mxu0 0.0
    %629 = vmatpush.msra.mxu0 0.0
    %630 = vmatpush.msra.mxu0 0.0
    %631 = vmatpush.msra.mxu0 0.0
    %632 = vmatpush.msra.mxu0 0.0
    %633 = vmatpush.msra.mxu0 0.0
    %634 = vmatpush.msra.mxu0 0.0
    %635 = vmatpush.msra.mxu0 %v619
    %636 = vmatpush.msra.mxu0 %v618
    %637 = vmatpush.msra.mxu0 %v617
    %638 = vmatpush.msra.mxu0 %v616
    %639 = vmatpush.msra.mxu0 %v615
    %640 = vmatpush.msra.mxu0 %v614
    %641 = vmatpush.msra.mxu0 %v613
    %642 = vmatpush.msra.mxu0 %v612
    %643 = vmatmul.f32.gmra.mxu0 %v625
    %v644 = vpop.f32.mrf.mxu0
    %v645 = vadd.f32 %v622, %v644
    %646 = vdwg.mxu0
    %vm647 = vcmp.ge.f32.partialorder %v645, 0.0
    %v648 = vmul.f32 %v645, 0.01
    %v649 = vsel %vm647, %v645, %v648
    %651 = vrot.lane.b32.xlu0 %v649, 2
    %v652 = vpop.permute.xlu0 %651
    %v654 = vsel %vm87, 0.0, %v652
    %v655 = vsel %vm89, %v654, 0.0
    %v657 = vrot.slane %v655, 6
    %658 = vrot.lane.b32.xlu0 %v657, 127
    %v659 = vpop.permute.xlu0 %658
    %v661 = vrot.slane %v655, 4
    %662 = vrot.lane.b32.xlu0 %v661, 126
    %v663 = vpop.permute.xlu0 %662
    %v665 = vrot.slane %v655, 2
    %666 = vrot.lane.b32.xlu0 %v665, 125
    %v667 = vpop.permute.xlu0 %666
    %669 = vrot.lane.b32.xlu0 %v655, 124
    %v670 = vpop.permute.xlu0 %669
    %vm671 = vcmask 1041408
    %v672 = vsel %vm671, %v655, %v659
    %v673 = vsel %vm112, %v672, %v663
    %vm674 = vcmask 1045504
    %v675 = vsel %vm674, %v673, %v667
    %v676 = vld [vmem:[%s18] sm:$0xff]
    %v677 = vld [vmem:[%s18 + $0x8] sm:$0xff]
    %v678 = vld [vmem:[%s18 + $0x10] sm:$0xff]
    %v679 = vld [vmem:[%s18 + $0x18] sm:$0xff]
    %v680 = vld [vmem:[%s19] sm:$0xff]
    %v681 = vld [vmem:[%s19 + $0x8] sm:$0xff]
    %v682 = vld [vmem:[%s19 + $0x10] sm:$0xff]
    %v683 = vld [vmem:[%s19 + $0x18] sm:$0xff]
    %685 = vset.pattern.permute.xlu0 0
    %686 = vperm.xlu0 %685, %v680
    %v687 = vpop.permute.xlu0 %686
    %690 = vset.pattern.permute.xlu0 0
    %691 = vperm.xlu0 %690, %v681
    %v692 = vpop.permute.xlu0 %691
    %695 = vset.pattern.permute.xlu0 0
    %696 = vperm.xlu0 %695, %v682
    %v697 = vpop.permute.xlu0 %696
    %700 = vset.pattern.permute.xlu0 0
    %701 = vperm.xlu0 %700, %v683
    %v702 = vpop.permute.xlu0 %701
    %vm704 = vcmask 80896
    %v706 = vsel %vm704, %v676, 0
    %v709 = vsel %vm704, %v677, 0
    %v712 = vsel %vm704, %v678, 0
    %v715 = vsel %vm704, %v679, 0
    %v717 = vsel %vm671, %v670, 0
    %719 = vmatpush.msra.mxu0 0.0
    %720 = vmatpush.msra.mxu0 0.0
    %721 = vmatpush.msra.mxu0 0.0
    %722 = vmatpush.msra.mxu0 0.0
    %723 = vmatpush.msra.mxu0 0.0
    %724 = vmatpush.msra.mxu0 0.0
    %725 = vmatpush.msra.mxu0 0.0
    %726 = vmatpush.msra.mxu0 0.0
    %727 = vmatpush.msra.mxu0 0.0
    %728 = vmatpush.msra.mxu0 0.0
    %729 = vmatpush.msra.mxu0 0.0
    %730 = vmatpush.msra.mxu0 0.0
    %731 = vmatpush.msra.mxu0 0.0
    %732 = vmatpush.msra.mxu0 0.0
    %733 = vmatpush.msra.mxu0 %v717
    %734 = vmatpush.msra.mxu0 %v675
    %735 = vmatmul.f32.gmra.mxu0 %v706
    %v736 = vpop.f32.mrf.mxu0
    %v737 = vadd.f32 %v687, %v736
    %738 = vmatmul.f32.gmra.mxu0 %v709
    %v739 = vpop.f32.mrf.mxu0
    %v740 = vadd.f32 %v692, %v739
    %741 = vmatmul.f32.gmra.mxu0 %v712
    %v742 = vpop.f32.mrf.mxu0
    %v743 = vadd.f32 %v697, %v742
    %744 = vmatmul.f32.gmra.mxu0 %v715
    %v745 = vpop.f32.mrf.mxu0
    %v746 = vadd.f32 %v702, %v745
    %747 = vdwg.mxu0
    %vm748 = vcmp.ge.f32.partialorder %v737, 0.0
    %vm749 = vcmp.ge.f32.partialorder %v740, 0.0
    %vm750 = vcmp.ge.f32.partialorder %v743, 0.0
    %vm751 = vcmp.ge.f32.partialorder %v746, 0.0
    %v752 = vmul.f32 %v737, 0.01
    %v753 = vmul.f32 %v740, 0.01
    %v754 = vmul.f32 %v743, 0.01
    %v755 = vmul.f32 %v746, 0.01
    %v756 = vsel %vm748, %v737, %v752
    %v757 = vsel %vm749, %v740, %v753
    %v758 = vsel %vm750, %v743, %v754
    %v759 = vsel %vm751, %v746, %v755
    %764 = vrot.lane.b32.xlu0 %v756, 1
    %v765 = vpop.permute.xlu0 %764
    %766 = vrot.lane.b32.xlu0 %v757, 1
    %v767 = vpop.permute.xlu0 %766
    %768 = vrot.lane.b32.xlu0 %v758, 1
    %v769 = vpop.permute.xlu0 %768
    %770 = vrot.lane.b32.xlu0 %v759, 1
    %v771 = vpop.permute.xlu0 %770
    %vm776 = vcmask 7168
    %v777 = vsel %vm776, 0.0, %v765
    %v778 = vsel %vm776, 0.0, %v767
    %v779 = vsel %vm776, 0.0, %v769
    %v780 = vsel %vm776, 0.0, %v771
    %vm781 = vcmask 138240
    %v782 = vsel %vm781, %v777, 0.0
    %v783 = vsel %vm781, %v778, 0.0
    %v784 = vsel %vm781, %v779, 0.0
    %v785 = vsel %vm781, %v780, 0.0
    %790 = vrot.lane.b32.xlu0 %v782, 127
    %v791 = vpop.permute.xlu0 %790
    %792 = vrot.lane.b32.xlu0 %v783, 127
    %v793 = vpop.permute.xlu0 %792
    %794 = vrot.lane.b32.xlu0 %v784, 127
    %v795 = vpop.permute.xlu0 %794
    %796 = vrot.lane.b32.xlu0 %v785, 127
    %v797 = vpop.permute.xlu0 %796
    %802 = vrot.lane.b32.xlu0 %v782, 126
    %v803 = vpop.permute.xlu0 %802
    %804 = vrot.lane.b32.xlu0 %v783, 126
    %v805 = vpop.permute.xlu0 %804
    %806 = vrot.lane.b32.xlu0 %v784, 126
    %v807 = vpop.permute.xlu0 %806
    %808 = vrot.lane.b32.xlu0 %v785, 126
    %v809 = vpop.permute.xlu0 %808
    %v814 = vld [vmem:[%s20] sm:$0xff]
    %v815 = vld [vmem:[%s21] sm:$0xff]
    %817 = vset.pattern.permute.xlu0 0
    %818 = vperm.xlu0 %817, %v815
    %v819 = vpop.permute.xlu0 %818
    %vm821 = vcmask 785408
    %v823 = vsel %vm821, %v814, 0
    %825 = vmatpush.msra.mxu0 0.0
    %826 = vmatpush.msra.mxu0 0.0
    %827 = vmatpush.msra.mxu0 0.0
    %828 = vmatpush.msra.mxu0 0.0
    %829 = vmatpush.msra.mxu0 %v809
    %830 = vmatpush.msra.mxu0 %v807
    %831 = vmatpush.msra.mxu0 %v805
    %832 = vmatpush.msra.mxu0 %v803
    %833 = vmatpush.msra.mxu0 %v797
    %834 = vmatpush.msra.mxu0 %v795
    %835 = vmatpush.msra.mxu0 %v793
    %836 = vmatpush.msra.mxu0 %v791
    %837 = vmatpush.msra.mxu0 %v785
    %838 = vmatpush.msra.mxu0 %v784
    %839 = vmatpush.msra.mxu0 %v783
    %840 = vmatpush.msra.mxu0 %v782
    %841 = vmatmul.f32.gmra.mxu0 %v823
    %v842 = vpop.f32.mrf.mxu0
    %v843 = vadd.f32 %v819, %v842
    %844 = vdwg.mxu0
    %v845 = vtanh.pop %v843
    %vm846 = vcmask 130048
    %847 = vst.msk [vmem:[#allocation2] sm:$0xff] %vm846, %v845
    // Predicated region
    $region90: #{vae_forward.1} parent=1 // pred_check
      _
    $region91: #{vae_forward.1} parent=1 // pred_check_branch
      %849 = sbr.rel (0) target = $region93
    $region92: #{vae_forward.1} parent=1 // pred_region
      %851 = vsyncadd [#allocation3], 0
      %s853 = sshll.u32 [#allocation2], 4
      %s854 = int_to_ptr.vmem [resolvable:$true] %s853
      %s855 = sshll.u32 %s22, 4
      %s856 = int_to_ptr.hbm [resolvable:$true] %s855
      %858 = dma.vmem_to_hbm [thread:$0]  %s854, 128, %s856, [#allocation3]
    $region93: #{vae_forward.1} parent=1 // pred_fallthru
      _
    // Predicated region
    $region94: #{vae_forward.1} parent=1 // pred_check
      _
    $region95: #{vae_forward.1} parent=1 // pred_check_branch
      %860 = sbr.rel (0) target = $region97
    $region96: #{vae_forward.1} parent=1 // pred_region
      %862 = vsyncadd [#allocation5], 0
      %s864 = sshll.u32 [#allocation4], 4
      %s865 = int_to_ptr.vmem [resolvable:$true] %s864
      %s866 = sshll.u32 %s23, 4
      %s867 = int_to_ptr.hbm [resolvable:$true] %s866
      %869 = dma.vmem_to_hbm [thread:$0]  %s865, 32, %s867, [#allocation5]
    $region97: #{vae_forward.1} parent=1 // pred_fallthru
      _
    // Predicated region
    $region98: #{vae_forward.1} parent=1 // pred_check
      _
    $region99: #{vae_forward.1} parent=1 // pred_check_branch
      %871 = sbr.rel (0) target = $region101
    $region100: #{vae_forward.1} parent=1 // pred_region
      %873 = vsyncadd [#allocation5], 0
      %s875 = sshll.u32 [#allocation6], 4
      %s876 = int_to_ptr.vmem [resolvable:$true] %s875
      %s877 = sshll.u32 %s24, 4
      %s878 = int_to_ptr.hbm [resolvable:$true] %s877
      %880 = dma.vmem_to_hbm [thread:$0]  %s876, 32, %s878, [#allocation5]
    $region101: #{vae_forward.1} parent=1 // pred_fallthru
      _
    // Predicated region
    $region102: #{vae_forward.1} parent=1 // pred_check
      _
    $region103: #{vae_forward.1} parent=1 // pred_check_branch
      %882 = sbr.rel (0) target = $region105
    $region104: #{vae_forward.1} parent=1 // pred_region
      %884 = dma.done [#allocation3], 128
    $region105: #{vae_forward.1} parent=1 // pred_fallthru
      _
    // Predicated region
    $region106: #{vae_forward.1} parent=1 // pred_check
      _
    $region107: #{vae_forward.1} parent=1 // pred_check_branch
      %886 = sbr.rel (0) target = $region109
    $region108: #{vae_forward.1} parent=1 // pred_region
      %888 = dma.done [#allocation5], 32
    $region109: #{vae_forward.1} parent=1 // pred_fallthru
      _
    // Predicated region
    $region110: #{vae_forward.1} parent=1 // pred_check
      _
    $region111: #{vae_forward.1} parent=1 // pred_check_branch
      %890 = sbr.rel (0) target = $region113
    $region112: #{vae_forward.1} parent=1 // pred_region
      %892 = dma.done [#allocation5], 32
    $region113: #{vae_forward.1} parent=1 // pred_fallthru
      _
    %893 = vsyncpa [#allocation3], 1
    %894 = vsyncpa [#allocation5], 1

</llo_original>
